<compile_context>
chip_gen: v7x
topology: tpu7x:2x2x1
jax: 0.10.0
libtpu: 0.0.40
codegen_flags: <defaults>
</compile_context>

<pallas_src>
import functools

import jax
import jax.numpy as jnp
from jax.experimental import pallas as pl
from jax.experimental.pallas import tpu as pltpu

LN_EPS = 1e-5      # nn.LayerNorm default eps
NORM_EPS = 1e-12   # F.normalize default eps


def _round_up(x, m):
    return (x + m - 1) // m * m


def mlp_with_pooling_kernel(x_ref, w0_ref, b0_ref, w1_ref, o_ref, acc_ref,
                            *, inv_s, pack, h):
    # grid = (batch_tiles, packed_seq_tiles); packed-seq axis is the reduction
    # axis (last in the grid) and owns the f32 accumulator.
    s = pl.program_id(1)

    @pl.when(s == 0)
    def _():
        acc_ref[...] = jnp.zeros_like(acc_ref)

    # ---- mean_pool_tokens, step 1: accumulate the token sum in f32 --------
    # x block: [TB, TS_rows, PW]; each 128-lane row packs `pack` tokens of
    # width h, so the stream is lane-dense (no 32->128 padding waste).
    acc_ref[...] += jnp.sum(x_ref[...].astype(jnp.float32), axis=1)

    @pl.when(s == pl.num_programs(1) - 1)
    def _():
        acc = acc_ref[...]                                     # [TB, PW]
        # Fold the `pack` token groups of h lanes each (XLU rolls; epilogue
        # only), then apply the single 1/S scale of the mean pool.
        fold = pack
        while fold > 1:
            acc = acc + pltpu.roll(acc, shift=(fold // 2) * h, axis=1)
            fold //= 2
        pooled = (acc[:, :h] if pack > 1 else acc) * inv_s     # [TB, H]

        # ---- LayerNorm(H, elementwise_affine=False) over the last dim -----
        mu = jnp.mean(pooled, axis=-1, keepdims=True)
        var = jnp.mean((pooled - mu) ** 2, axis=-1, keepdims=True)
        hh = (pooled - mu) * jax.lax.rsqrt(var + LN_EPS)

        # ---- FC layer 0: Linear(H->H1, bias) -> ReLU -> L2 normalize -------
        # w0/b0 are zero-padded to 128 output columns; ReLU(0)=0 and the zero
        # columns contribute nothing to the L2 norm or the next matmul.
        hh = jnp.dot(hh, w0_ref[...], preferred_element_type=jnp.float32)
        hh = jnp.maximum(hh + b0_ref[...], 0.0)
        inv = jax.lax.rsqrt(
            jnp.maximum(jnp.sum(hh * hh, axis=-1, keepdims=True),
                        NORM_EPS * NORM_EPS))
        hh = hh * inv

        # ---- FC layer 1: Linear(H1->H2, no bias) -> L2 normalize -----------
        # w1 is zero-padded to (128, 128); padded rows meet zero activations
        # and padded output columns stay exactly 0 (no effect on the L2 norm).
        hh = jnp.dot(hh, w1_ref[...], preferred_element_type=jnp.float32)
        inv = jax.lax.rsqrt(
            jnp.maximum(jnp.sum(hh * hh, axis=-1, keepdims=True),
                        NORM_EPS * NORM_EPS))
        o_ref[...] = (hh * inv).astype(o_ref.dtype)


def mlp_with_pooling(x, w0, b0, w1, *, tb=256, ts=256):
    """x: [B, S, H]; w0: [H, H1] (transposed vs torch); b0: [1, H1]; w1: [H1, H2].

    Returns [B, H2].
    """
    B, S, H = x.shape
    H1 = w0.shape[1]
    H2 = w1.shape[1]
    itemsize = jnp.dtype(x.dtype).itemsize

    # ---- lane-dense packing of the token stream ----------------------------
    pack = (128 // H) if (H <= 128 and 128 % H == 0) else 1
    PW = pack * H                                   # packed row width (lanes)
    rows = pl.cdiv(S, pack)                         # packed rows of tokens

    # ---- sequence tiling (reduction axis) -----------------------------------
    ts_rows = max(1, ts // pack)
    if ts_rows >= rows:
        ts_rows = rows                              # single step, full-dim block
        rows_pad = rows
    else:
        ts_rows = max(8, ts_rows // 8 * 8)          # (8,128) sublane constraint
        rows_pad = _round_up(rows, ts_rows)

    s_pad = rows_pad * pack                         # tokens incl. zero padding
    if s_pad != S:
        # Zero tokens add 0 to the pooled sum; inv_s keeps the true 1/S.
        x = jnp.pad(x, ((0, 0), (0, s_pad - S), (0, 0)))
    xp = x.reshape(B, rows_pad, PW)                 # free row-major reshape

    # ---- batch tiling (parallel axis) ---------------------------------------
    tb = min(tb, B)
    if B >= 16:
        # >= 2 batch tiles so v7x megacore can shard the "parallel" axis.
        tb = min(tb, _round_up(pl.cdiv(B, 2), 8))
    # TODO(synk): if B % tb != 0 the tail tile may pool garbage rows; they are
    # dropped on store so visible output is correct.

    grid = (pl.cdiv(B, tb), rows_pad // ts_rows)

    # ---- lane-dense weights / output ----------------------------------------
    H1_pad = _round_up(H1, 128)
    H2_pad = _round_up(H2, 128)
    w0p = jnp.pad(w0, ((0, 0), (0, H1_pad - H1))) if H1_pad != H1 else w0
    b0p = jnp.pad(b0, ((0, 0), (0, H1_pad - H1))) if H1_pad != H1 else b0
    w1p = (jnp.pad(w1, ((0, H1_pad - H1), (0, H2_pad - H2)))
           if (H1_pad != H1 or H2_pad != H2) else w1)
    wsize = w0p.size + b0p.size + w1p.size
    w_item = jnp.dtype(w0p.dtype).itemsize

    # ---- VMEM budget: double-buffered x + out, resident weights, f32 acc ----
    vmem_bytes = (2 * tb * ts_rows * PW * itemsize      # x double buffer
                  + 2 * tb * H2_pad * itemsize          # out double buffer
                  + tb * PW * 4                         # f32 accumulator
                  + 2 * wsize * w_item)                 # resident weights
    vmem_limit = int(min(max(vmem_bytes + (2 << 20), 8 << 20), 48 << 20))

    cost = pl.CostEstimate(
        flops=2 * B * s_pad * H + 2 * B * (H * H1_pad + H1_pad * H2_pad),
        transcendentals=3 * B,
        bytes_accessed=(xp.size * itemsize + wsize * w_item
                        + B * H2_pad * itemsize),
    )

    out = pl.pallas_call(
        functools.partial(mlp_with_pooling_kernel,
                          inv_s=float(1.0 / S), pack=pack, h=H),
        out_shape=jax.ShapeDtypeStruct((B, H2_pad), x.dtype),
        grid_spec=pltpu.PrefetchScalarGridSpec(
            num_scalar_prefetch=0,
            grid=grid,
            in_specs=[
                pl.BlockSpec((tb, ts_rows, PW), lambda b, s: (b, s, 0)),   # x
                pl.BlockSpec((H, H1_pad), lambda b, s: (0, 0)),            # w0
                pl.BlockSpec((1, H1_pad), lambda b, s: (0, 0)),            # b0
                pl.BlockSpec((H1_pad, H2_pad), lambda b, s: (0, 0)),       # w1
            ],
            out_specs=pl.BlockSpec((tb, H2_pad), lambda b, s: (b, 0)),
            scratch_shapes=[pltpu.VMEM((tb, PW), jnp.float32)],            # sum acc
        ),
        compiler_params=pltpu.CompilerParams(
            dimension_semantics=("parallel", "arbitrary"),
            vmem_limit_bytes=vmem_limit,
        ),
        cost_estimate=cost,
    )(xp, w0p, b0p, w1p)

    return out[:, :H2]


def reference(x, w0, b0, w1):
    pooled = jnp.mean(x, axis=1)
    mu = jnp.mean(pooled, axis=-1, keepdims=True)
    var = jnp.mean((pooled - mu) ** 2, axis=-1, keepdims=True)
    h = (pooled - mu) / jnp.sqrt(var + LN_EPS)
    h = jnp.maximum(h @ w0 + b0, 0.0)
    h = h / jnp.maximum(jnp.linalg.norm(h, axis=-1, keepdims=True), NORM_EPS)
    h = h @ w1
    h = h / jnp.maximum(jnp.linalg.norm(h, axis=-1, keepdims=True), NORM_EPS)
    return h


if __name__ == "__main__":
    B, S, H, H1, H2 = 2, 8, 32, 64, 16

    key = jax.random.PRNGKey(0)
    kx, kw0, kb0, kw1 = jax.random.split(key, 4)

    # Deterministic synthetic parameters (shapes from the module __init__).
    # Torch Linear weight is [out, in]; we store the transposed [in, out] form.
    x = jax.random.normal(kx, (B, S, H), dtype=jnp.float32)
    w0 = jax.random.normal(kw0, (H, H1), dtype=jnp.float32) * (1.0 / jnp.sqrt(H))
    b0 = jax.random.normal(kb0, (1, H1), dtype=jnp.float32) * 0.01
    w1 = jax.random.normal(kw1, (H1, H2), dtype=jnp.float32) * (1.0 / jnp.sqrt(H1))

    out = jax.block_until_ready(mlp_with_pooling(x, w0, b0, w1))

    ref = reference(x, w0, b0, w1)
    assert out.shape == (B, H2)
    assert jnp.allclose(out, ref, atol=1e-5, rtol=1e-5), "mismatch vs JAX reference"

    print("KERNEL_OK")
</pallas_src>

<mosaic_0001>
module attributes {stable_mosaic.version = 11 : i64} {
  func.func @mlp_with_pooling_kernel(%arg0: i32, %arg1: i32, %arg2: memref<2x2x128xf32, #tpu.memory_space<vmem>>, %arg3: memref<32x128xf32, #tpu.memory_space<vmem>>, %arg4: memref<1x128xf32, #tpu.memory_space<vmem>>, %arg5: memref<128x128xf32, #tpu.memory_space<vmem>>, %arg6: memref<2x128xf32, #tpu.memory_space<vmem>>, %arg7: memref<2x128xf32, #tpu.memory_space<vmem>>) attributes {dimension_semantics = [#tpu.dimension_semantics<parallel>, #tpu.dimension_semantics<arbitrary>], iteration_bounds = array<i64: 1, 1>, scalar_prefetch = 0 : i64, scratch_operands = 1 : i64, tpu.core_type = #tpu.core_type<tc>, window_params = [{transform_indices = @transform_0, window_bounds = array<i64: 2, 2, 128>}, {pipeline_mode = #tpu.pipeline_mode<synchronous>, transform_indices = @transform_1, window_bounds = array<i64: 32, 128>}, {pipeline_mode = #tpu.pipeline_mode<synchronous>, transform_indices = @transform_2, window_bounds = array<i64: 1, 128>}, {pipeline_mode = #tpu.pipeline_mode<synchronous>, transform_indices = @transform_3, window_bounds = array<i64: 128, 128>}, {transform_indices = @transform_4, window_bounds = array<i64: 2, 128>}]} {
    %c0_i32 = arith.constant 0 : i32
    %0 = arith.cmpi eq, %arg1, %c0_i32 : i32
    %1 = arith.extui %0 : i1 to i32
    %c0_i32_0 = arith.constant 0 : i32
    %2 = arith.cmpi ne, %1, %c0_i32_0 : i32
    scf.if %2 {
      %cst_9 = arith.constant 0.000000e+00 : f32
      %11 = vector.broadcast %cst_9 : f32 to vector<2x128xf32>
      %c0_10 = arith.constant 0 : index
      %c0_11 = arith.constant 0 : index
      %12 = vector.load %arg7[%c0_10, %c0_11] : memref<2x128xf32, #tpu.memory_space<vmem>>, vector<2x128xf32>
      tpu.vector_store %arg7[%c0_10, %c0_11], %11 {strides = array<i32>} : memref<2x128xf32, #tpu.memory_space<vmem>>, vector<2x128xf32>,
    } else {
    }
    %c0 = arith.constant 0 : index
    %c0_1 = arith.constant 0 : index
    %3 = vector.load %arg7[%c0, %c0_1] : memref<2x128xf32, #tpu.memory_space<vmem>>, vector<2x128xf32>
    %c0_2 = arith.constant 0 : index
    %c0_3 = arith.constant 0 : index
    %c0_4 = arith.constant 0 : index
    %4 = vector.load %arg2[%c0_2, %c0_3, %c0_4] : memref<2x2x128xf32, #tpu.memory_space<vmem>>, vector<2x2x128xf32>
    %cst = arith.constant dense<0.000000e+00> : vector<2x128xf32>
    %5 = vector.multi_reduction <add>, %4, %cst [1] : vector<2x2x128xf32> to vector<2x128xf32>
    %6 = arith.addf %3, %5 : vector<2x128xf32>
    %c0_5 = arith.constant 0 : index
    %c0_6 = arith.constant 0 : index
    %7 = vector.load %arg7[%c0_5, %c0_6] : memref<2x128xf32, #tpu.memory_space<vmem>>, vector<2x128xf32>
    tpu.vector_store %arg7[%c0_5, %c0_6], %6 {strides = array<i32>} : memref<2x128xf32, #tpu.memory_space<vmem>>, vector<2x128xf32>,
    %c0_i32_7 = arith.constant 0 : i32
    %8 = arith.cmpi eq, %arg1, %c0_i32_7 : i32
    %9 = arith.extui %8 : i1 to i32
    %c0_i32_8 = arith.constant 0 : i32
    %10 = arith.cmpi ne, %9, %c0_i32_8 : i32
    scf.if %10 {
      %c0_9 = arith.constant 0 : index
      %c0_10 = arith.constant 0 : index
      %11 = vector.load %arg7[%c0_9, %c0_10] : memref<2x128xf32, #tpu.memory_space<vmem>>, vector<2x128xf32>
      %c64_i32 = arith.constant 64 : i32
      %12 = tpu.dynamic_rotate %11 by %c64_i32 dim 1 : vector<2x128xf32>, i32 -> vector<2x128xf32>
      %13 = arith.addf %11, %12 : vector<2x128xf32>
      %c32_i32 = arith.constant 32 : i32
      %14 = tpu.dynamic_rotate %13 by %c32_i32 dim 1 : vector<2x128xf32>, i32 -> vector<2x128xf32>
      %15 = arith.addf %13, %14 : vector<2x128xf32>
      %16 = vector.extract_strided_slice %15 {offsets = [0, 0], sizes = [2, 32], strides = [1, 1]} : vector<2x128xf32> to vector<2x32xf32>
      %cst_11 = arith.constant 1.250000e-01 : f32
      %17 = vector.broadcast %cst_11 : f32 to vector<2x32xf32>
      %18 = arith.mulf %16, %17 : vector<2x32xf32>
      %cst_12 = arith.constant dense<0.000000e+00> : vector<2xf32>
      %19 = vector.multi_reduction <add>, %18, %cst_12 [1] : vector<2x32xf32> to vector<2xf32>
      %20 = vector.shape_cast %19 : vector<2xf32> to vector<2x1xf32>
      %cst_13 = arith.constant 3.200000e+01 : f32
      %21 = vector.broadcast %cst_13 : f32 to vector<2x1xf32>
      %22 = arith.divf %20, %21 : vector<2x1xf32>
      %23 = vector.broadcast %22 : vector<2x1xf32> to vector<2x32xf32>
      %24 = arith.subf %18, %23 : vector<2x32xf32>
      %25 = arith.mulf %24, %24 : vector<2x32xf32>
      %cst_14 = arith.constant dense<0.000000e+00> : vector<2xf32>
      %26 = vector.multi_reduction <add>, %25, %cst_14 [1] : vector<2x32xf32> to vector<2xf32>
      %27 = vector.shape_cast %26 : vector<2xf32> to vector<2x1xf32>
      %cst_15 = arith.constant 3.200000e+01 : f32
      %28 = vector.broadcast %cst_15 : f32 to vector<2x1xf32>
      %29 = arith.divf %27, %28 : vector<2x1xf32>
      %30 = vector.broadcast %22 : vector<2x1xf32> to vector<2x32xf32>
      %31 = arith.subf %18, %30 : vector<2x32xf32>
      %cst_16 = arith.constant 9.99999974E-6 : f32
      %32 = vector.broadcast %cst_16 : f32 to vector<2x1xf32>
      %33 = arith.addf %29, %32 : vector<2x1xf32>
      %34 = math.rsqrt %33 : vector<2x1xf32>
      %35 = vector.broadcast %34 : vector<2x1xf32> to vector<2x32xf32>
      %36 = arith.mulf %31, %35 : vector<2x32xf32>
      %c0_17 = arith.constant 0 : index
      %c0_18 = arith.constant 0 : index
      %37 = vector.load %arg3[%c0_17, %c0_18] : memref<32x128xf32, #tpu.memory_space<vmem>>, vector<32x128xf32>
      %cst_19 = arith.constant dense<0.000000e+00> : vector<2x128xf32>
      %38 = tpu.matmul %36, %37, %cst_19 {dimension_numbers = #tpu.dot_dimension_numbers<[1], [0], [0], [1], [0, 0, 1, 1], [], []>} : vector<2x32xf32>, vector<32x128xf32>, vector<2x128xf32> -> vector<2x128xf32>
      %c0_20 = arith.constant 0 : index
      %c0_21 = arith.constant 0 : index
      %39 = vector.load %arg4[%c0_20, %c0_21] : memref<1x128xf32, #tpu.memory_space<vmem>>, vector<1x128xf32>
      %40 = vector.broadcast %39 : vector<1x128xf32> to vector<2x128xf32>
      %41 = arith.addf %38, %40 : vector<2x128xf32>
      %cst_22 = arith.constant 0.000000e+00 : f32
      %42 = vector.broadcast %cst_22 : f32 to vector<2x128xf32>
      %43 = arith.maximumf %41, %42 : vector<2x128xf32>
      %44 = arith.mulf %43, %43 : vector<2x128xf32>
      %cst_23 = arith.constant dense<0.000000e+00> : vector<2xf32>
      %45 = vector.multi_reduction <add>, %44, %cst_23 [1] : vector<2x128xf32> to vector<2xf32>
      %46 = vector.shape_cast %45 : vector<2xf32> to vector<2x1xf32>
      %cst_24 = arith.constant 1.000000e-24 : f32
      %47 = vector.broadcast %cst_24 : f32 to vector<2x1xf32>
      %48 = arith.maximumf %46, %47 : vector<2x1xf32>
      %49 = math.rsqrt %48 : vector<2x1xf32>
      %50 = vector.broadcast %49 : vector<2x1xf32> to vector<2x128xf32>
      %51 = arith.mulf %43, %50 : vector<2x128xf32>
      %c0_25 = arith.constant 0 : index
      %c0_26 = arith.constant 0 : index
      %52 = vector.load %arg5[%c0_25, %c0_26] : memref<128x128xf32, #tpu.memory_space<vmem>>, vector<128x128xf32>
      %cst_27 = arith.constant dense<0.000000e+00> : vector<2x128xf32>
      %53 = tpu.matmul %51, %52, %cst_27 {dimension_numbers = #tpu.dot_dimension_numbers<[1], [0], [0], [1], [0, 0, 1, 1], [], []>} : vector<2x128xf32>, vector<128x128xf32>, vector<2x128xf32> -> vector<2x128xf32>
      %54 = arith.mulf %53, %53 : vector<2x128xf32>
      %cst_28 = arith.constant dense<0.000000e+00> : vector<2xf32>
      %55 = vector.multi_reduction <add>, %54, %cst_28 [1] : vector<2x128xf32> to vector<2xf32>
      %56 = vector.shape_cast %55 : vector<2xf32> to vector<2x1xf32>
      %cst_29 = arith.constant 1.000000e-24 : f32
      %57 = vector.broadcast %cst_29 : f32 to vector<2x1xf32>
      %58 = arith.maximumf %56, %57 : vector<2x1xf32>
      %59 = math.rsqrt %58 : vector<2x1xf32>
      %60 = vector.broadcast %59 : vector<2x1xf32> to vector<2x128xf32>
      %61 = arith.mulf %53, %60 : vector<2x128xf32>
      %c0_30 = arith.constant 0 : index
      %c0_31 = arith.constant 0 : index
      %62 = vector.load %arg6[%c0_30, %c0_31] : memref<2x128xf32, #tpu.memory_space<vmem>>, vector<2x128xf32>
      tpu.vector_store %arg6[%c0_30, %c0_31], %61 {strides = array<i32>} : memref<2x128xf32, #tpu.memory_space<vmem>>, vector<2x128xf32>,
    } else {
    }
    return
  }
  func.func @transform_0(%arg0: i32, %arg1: i32) -> (i32, i32, i32) {
    %c0_i32 = arith.constant 0 : i32
    %c0_i32_0 = arith.constant 0 : i32
    return %arg0, %arg1, %c0_i32 : i32, i32, i32
  }
  func.func @transform_1(%arg0: i32, %arg1: i32) -> (i32, i32) {
    %c0_i32 = arith.constant 0 : i32
    %c0_i32_0 = arith.constant 0 : i32
    %c0_i32_1 = arith.constant 0 : i32
    return %c0_i32, %c0_i32_0 : i32, i32
  }
  func.func @transform_2(%arg0: i32, %arg1: i32) -> (i32, i32) {
    %c0_i32 = arith.constant 0 : i32
    %c0_i32_0 = arith.constant 0 : i32
    %c0_i32_1 = arith.constant 0 : i32
    return %c0_i32, %c0_i32_0 : i32, i32
  }
  func.func @transform_3(%arg0: i32, %arg1: i32) -> (i32, i32) {
    %c0_i32 = arith.constant 0 : i32
    %c0_i32_0 = arith.constant 0 : i32
    %c0_i32_1 = arith.constant 0 : i32
    return %c0_i32, %c0_i32_0 : i32, i32
  }
  func.func @transform_4(%arg0: i32, %arg1: i32) -> (i32, i32) {
    %c0_i32 = arith.constant 0 : i32
    %c0_i32_0 = arith.constant 0 : i32
    return %arg0, %c0_i32 : i32, i32
  }
}

</mosaic_0001>

<llo_original>
// kernel: tpu_custom_call.1
$region0: #{tpu_custom_call.1}
  #allocation0 [shape = 'u32[]', space=smem, size = 0x4, offset = 0x4, fixed_abs, tag = 'smem constant byte address 0x4 - core index']
  #allocation1 [shape = 'u32[144,128]{1,0:T(1,128)}', space=vmem, size = 0x12000, scoped, tag = 'internal scratch']
  #allocation2 [shape = 'f32[2,128]{1,0:T(2,128)}', space=vmem, size = 0x400, scoped, tag = 'scratch operand']
  %s0 = inlined_call_operand.hbm [shape: f32[2,2,128], index: 0, kind: input, shape index: {}]
  %s1 = inlined_call_operand.hbm [shape: f32[32,128], index: 1, kind: input, shape index: {}]
  %s2 = inlined_call_operand.vmem [shape: f32[1,128], index: 2, kind: input, shape index: {}]
  %s3 = inlined_call_operand.hbm [shape: f32[128,128], index: 3, kind: input, shape index: {}]
  %s4 = inlined_call_operand.hbm [shape: f32[2,128], index: 4, kind: output, shape index: {}]
  %s5 = sld [smem:[#allocation0]]
  $region46: #{tpu_custom_call.1} parent=0
    _
  %s7 = ssub.s32 1, %s5
  %s8 = scalar_select 0, %s7, %s5
  $region1: #{tpu_custom_call.1} parent=0
    #allocation3 [shape = 'u8[2048]{0}', space=vmem, size = 0x800, scoped, tag = 'input window, operand 0, single buffered']
    #allocation4 [shape = 's32[1]{0}', space=sflag, size = 0x4, scoped, tag = 'scoped memory for tpu_custom_call.1']
    #allocation5 [shape = 's32[1]{0}', space=sflag, size = 0x4, scoped, tag = 'scoped memory for tpu_custom_call.1']
    #allocation6 [shape = 'u8[16384]{0}', space=vmem, size = 0x4000, scoped, tag = 'input window, operand 1, single buffered']
    #allocation7 [shape = 's32[1]{0}', space=sflag, size = 0x4, scoped, tag = 'scoped memory for tpu_custom_call.1']
    #allocation8 [shape = 'u8[65536]{0}', space=vmem, size = 0x10000, scoped, tag = 'input window, operand 3, single buffered']
    #allocation9 [shape = 'u8[1024]{0}', space=vmem, size = 0x400, scoped, tag = 'output window, operand 0, single buffered']
    %9 = vsyncpa [#allocation4], 0
    %10 = vsyncpa [#allocation7], 0
    %11 = vsyncpa [#allocation5], 0
    // Predicated region
    $region2: #{tpu_custom_call.1} parent=1 // pred_check
      _
    $region3: #{tpu_custom_call.1} parent=1 // pred_check_branch
      %13 = sbr.rel (0) target = $region5
    $region4: #{tpu_custom_call.1} parent=1 // pred_region
      %s15 = ssub.s32 64, 64
      %16 = vsyncadd [#allocation4], %s15
      %s17 = sshll.u32 [#allocation3], 4
      %s18 = int_to_ptr.vmem [resolvable:$true] %s17
      %23 = dma.hbm_to_vmem [thread:$0]  %s0, 64, %s18, [#allocation4], 32, 32, 2
    $region5: #{tpu_custom_call.1} parent=1 // pred_fallthru
      _
    // Predicated region
    $region6: #{tpu_custom_call.1} parent=1 // pred_check
      _
    $region7: #{tpu_custom_call.1} parent=1 // pred_check_branch
      %25 = sbr.rel (0) target = $region9
    $region8: #{tpu_custom_call.1} parent=1 // pred_region
      %s27 = ssub.s32 512, 512
      %28 = vsyncadd [#allocation7], %s27
      %s29 = sshll.u32 [#allocation6], 4
      %s30 = int_to_ptr.vmem [resolvable:$true] %s29
      %35 = dma.hbm_to_vmem [thread:$0]  %s1, 512, %s30, [#allocation7], 128, 128, 8
    $region9: #{tpu_custom_call.1} parent=1 // pred_fallthru
      _
    // Predicated region
    $region10: #{tpu_custom_call.1} parent=1 // pred_check
      _
    $region11: #{tpu_custom_call.1} parent=1 // pred_check_branch
      %37 = sbr.rel (0) target = $region13
    $region12: #{tpu_custom_call.1} parent=1 // pred_region
      _
    $region13: #{tpu_custom_call.1} parent=1 // pred_fallthru
      _
    // Predicated region
    $region14: #{tpu_custom_call.1} parent=1 // pred_check
      _
    $region15: #{tpu_custom_call.1} parent=1 // pred_check_branch
      %39 = sbr.rel (0) target = $region17
    $region16: #{tpu_custom_call.1} parent=1 // pred_region
      %s41 = ssub.s32 2048, 2048
      %42 = vsyncadd [#allocation7], %s41
      %s43 = sshll.u32 [#allocation8], 4
      %s44 = int_to_ptr.vmem [resolvable:$true] %s43
      %49 = dma.hbm_to_vmem [thread:$0]  %s3, 2048, %s44, [#allocation7], 128, 128, 8
    $region17: #{tpu_custom_call.1} parent=1 // pred_fallthru
      _
    // Predicated region
    $region18: #{tpu_custom_call.1} parent=1 // pred_check
      _
    $region19: #{tpu_custom_call.1} parent=1 // pred_check_branch
      %51 = sbr.rel (0) target = $region21
    $region20: #{tpu_custom_call.1} parent=1 // pred_region
      %52 = dma.done [#allocation4], 64
    $region21: #{tpu_custom_call.1} parent=1 // pred_fallthru
      _
    // Predicated region
    $region22: #{tpu_custom_call.1} parent=1 // pred_check
      _
    $region23: #{tpu_custom_call.1} parent=1 // pred_check_branch
      %54 = sbr.rel (0) target = $region25
    $region24: #{tpu_custom_call.1} parent=1 // pred_region
      %55 = dma.done [#allocation7], 512
    $region25: #{tpu_custom_call.1} parent=1 // pred_fallthru
      _
    // Predicated region
    $region26: #{tpu_custom_call.1} parent=1 // pred_check
      _
    $region27: #{tpu_custom_call.1} parent=1 // pred_check_branch
      %57 = sbr.rel (0) target = $region29
    $region28: #{tpu_custom_call.1} parent=1 // pred_region
      %58 = dma.done [#allocation7], 2048
    $region29: #{tpu_custom_call.1} parent=1 // pred_fallthru
      _
    %p59 = scmp.eq.s32.totalorder 0, 0
    // Predicated region
    $region30: #{tpu_custom_call.1} parent=1 // pred_check
      %p60 = pneg %p59
    $region31: #{tpu_custom_call.1} parent=1 // pred_check_branch
      %62 = sbr.rel (%p60) target = $region33
    $region32: #{tpu_custom_call.1} parent=1 // pred_region
      %63 = vst [vmem:[#allocation2] sm:$0x3] 0.0
    $region33: #{tpu_custom_call.1} parent=1 // pred_fallthru
      _
    %v64 = vld [vmem:[#allocation2] sm:$0x3]
    %v65 = vld [vmem:[#allocation3] sm:$0x3]
    %v66 = vld [vmem:[#allocation3 + $0x2] sm:$0x3]
    %vm67 = vcmask 1041408
    %v68 = vsel %vm67, %v65, 0.0
    %v69 = vrot.slane %v68, 4
    %v70 = vadd.f32 %v68, %v69
    %v71 = vrot.slane %v70, 2
    %v72 = vadd.f32 %v70, %v71
    %v73 = vrot.slane %v72, 1
    %v74 = vadd.f32 %v72, %v73
    %v75 = vsel %vm67, %v66, 0.0
    %v76 = vrot.slane %v75, 4
    %v77 = vadd.f32 %v75, %v76
    %v78 = vrot.slane %v77, 2
    %v79 = vadd.f32 %v77, %v78
    %v80 = vrot.slane %v79, 1
    %v81 = vadd.f32 %v79, %v80
    %vm84 = vcmask 1041409
    %v85 = vsel %vm84, %v81, %v74
    %v87 = vadd.f32 %v64, %v85
    %88 = vst [vmem:[#allocation2] sm:$0x3] %v87
    // Predicated region
    $region34: #{tpu_custom_call.1} parent=1 // pred_check
      %p89 = pneg %p59
    $region35: #{tpu_custom_call.1} parent=1 // pred_check_branch
      %91 = sbr.rel (%p89) target = $region37
    $region36: #{tpu_custom_call.1} parent=1 // pred_region
      %v92 = vld [vmem:[#allocation2] sm:$0x3]
      %93 = vrot.lane.b32.xlu0 %v92, 64
      %v94 = vpop.permute.xlu0 %93
      %v95 = vadd.f32 %v92, %v94
      %96 = vrot.lane.b32.xlu0 %v95, 32
      %v97 = vpop.permute.xlu0 %96
      %v98 = vadd.f32 %v95, %v97
      %v99 = vmul.f32 %v98, 0.125
      %vm100 = vcmask 254976
      %v101 = vsel %vm100, %v99, 0.0
      %102 = vadd.xlane.f32.xlu0 %v101
      %v103 = vpop.xlane.xlu0 %102
      %v104 = vrcp.pop 32.0
      %v105 = vmul.f32 %v103, %v104
      %v106 = vsub.f32 %v99, %v105
      %v107 = vmul.f32 %v106, %v106
      %v108 = vsel %vm100, %v107, 0.0
      %109 = vadd.xlane.f32.xlu0 %v108
      %v110 = vpop.xlane.xlu0 %109
      %v111 = vmul.f32 %v110, %v104
      %v112 = vadd.f32 %v111, 1e-05
      %v113 = vrsqrt.pop %v112
      %v114 = vmul.f32 %v106, %v113
      %v115 = vld [vmem:[#allocation6] sm:$0xff]
      %v116 = vld [vmem:[#allocation6 + $0x8] sm:$0xff]
      %v117 = vld [vmem:[#allocation6 + $0x10] sm:$0xff]
      %v118 = vld [vmem:[#allocation6 + $0x18] sm:$0xff]
      %v119 = vld [vmem:[%s2] sm:$0x1]
      %v121 = vlaneseq
      %v122 = vshrl.u32 %v121, 7
      %v123 = vsub.s32 0, %v122
      %v124 = vrot.slane %v119, %v123
      %vm126 = vcmask 261120
      %v128 = vsel %vm126, %v114, 0
      %130 = vmatprep.subr.mxu0 0.0
      %131 = vmatpush1.msra.mxu0 %v115
      %132 = vmatprep.subr.mxu0 0.0
      %133 = vmatpush1.msra.mxu0 %v116
      %134 = vmatprep.subr.mxu0 0.0
      %135 = vmatpush1.msra.mxu0 %v117
      %136 = vmatprep.subr.mxu0 0.0
      %137 = vmatpush1.msra.mxu0 %v118
      %138 = vmatprep.subr.mxu0 0.0
      %139 = vmatpush1.msra.mxu0 0.0
      %140 = vmatprep.subr.mxu0 0.0
      %141 = vmatpush1.msra.mxu0 0.0
      %142 = vmatprep.subr.mxu0 0.0
      %143 = vmatpush1.msra.mxu0 0.0
      %144 = vmatprep.subr.mxu0 0.0
      %145 = vmatpush1.msra.mxu0 0.0
      %146 = vmatprep.subr.mxu0 0.0
      %147 = vmatpush1.msra.mxu0 0.0
      %148 = vmatprep.subr.mxu0 0.0
      %149 = vmatpush1.msra.mxu0 0.0
      %150 = vmatprep.subr.mxu0 0.0
      %151 = vmatpush1.msra.mxu0 0.0
      %152 = vmatprep.subr.mxu0 0.0
      %153 = vmatpush1.msra.mxu0 0.0
      %154 = vmatprep.subr.mxu0 0.0
      %155 = vmatpush1.msra.mxu0 0.0
      %156 = vmatprep.subr.mxu0 0.0
      %157 = vmatpush1.msra.mxu0 0.0
      %158 = vmatprep.subr.mxu0 0.0
      %159 = vmatpush1.msra.mxu0 0.0
      %160 = vmatprep.subr.mxu0 0.0
      %161 = vmatpush1.msra.mxu0 0.0
      %162 = vmatprep.subr.mxu0 0.0
      %163 = vmatpush1.msra.mxu0 0.0
      %164 = vmatprep.subr.mxu0 0.0
      %165 = vmatpush1.msra.mxu0 0.0
      %166 = vmatprep.subr.mxu0 0.0
      %167 = vmatpush1.msra.mxu0 0.0
      %168 = vmatprep.subr.mxu0 0.0
      %169 = vmatpush1.msra.mxu0 0.0
      %170 = vmatprep.subr.mxu0 0.0
      %171 = vmatpush1.msra.mxu0 0.0
      %172 = vmatprep.subr.mxu0 0.0
      %173 = vmatpush1.msra.mxu0 0.0
      %174 = vmatprep.subr.mxu0 0.0
      %175 = vmatpush1.msra.mxu0 0.0
      %176 = vmatprep.subr.mxu0 0.0
      %177 = vmatpush1.msra.mxu0 0.0
      %178 = vmatprep.subr.mxu0 0.0
      %179 = vmatpush1.msra.mxu0 0.0
      %180 = vmatprep.subr.mxu0 0.0
      %181 = vmatpush1.msra.mxu0 0.0
      %182 = vmatprep.subr.mxu0 0.0
      %183 = vmatpush1.msra.mxu0 0.0
      %184 = vmatprep.subr.mxu0 0.0
      %185 = vmatpush1.msra.mxu0 0.0
      %186 = vmatprep.subr.mxu0 0.0
      %187 = vmatpush1.msra.mxu0 0.0
      %188 = vmatprep.subr.mxu0 0.0
      %189 = vmatpush1.msra.mxu0 0.0
      %190 = vmatprep.subr.mxu0 0.0
      %191 = vmatpush1.msra.mxu0 0.0
      %192 = vmatprep.subr.mxu0 0.0
      %193 = vmatpush1.msra.mxu0 0.0
      %194 = vmatprep.mubr.f32.mxu0 0.0
      %195 = vmatmul.mubr.f32.gmra.mrb[0].mxu0 %v128
      %v196 = vpop.f32.mrb[0].mxu0
      %v197 = vadd.f32 %v124, %v196
      %v198 = vpop.f32.mrb[0].mxu0
      %199 = vdwg.mxu0
      %v200 = vmax.f32 %v197, 0.0
      %v201 = vmul.f32 %v200, %v200
      %v202 = vsel %vm67, %v201, 0.0
      %203 = vadd.xlane.f32.xlu0 %v202
      %v204 = vpop.xlane.xlu0 %203
      %v205 = vmax.f32 %v204, 1e-24
      %v206 = vrsqrt.pop %v205
      %v207 = vmul.f32 %v200, %v206
      %v208 = vld [vmem:[#allocation8] sm:$0xff]
      %v209 = vld [vmem:[#allocation8 + $0x8] sm:$0xff]
      %v210 = vld [vmem:[#allocation8 + $0x10] sm:$0xff]
      %v211 = vld [vmem:[#allocation8 + $0x18] sm:$0xff]
      %v212 = vld [vmem:[#allocation8 + $0x20] sm:$0xff]
      %v213 = vld [vmem:[#allocation8 + $0x28] sm:$0xff]
      %v214 = vld [vmem:[#allocation8 + $0x30] sm:$0xff]
      %v215 = vld [vmem:[#allocation8 + $0x38] sm:$0xff]
      %v216 = vld [vmem:[#allocation8 + $0x40] sm:$0xff]
      %v217 = vld [vmem:[#allocation8 + $0x48] sm:$0xff]
      %v218 = vld [vmem:[#allocation8 + $0x50] sm:$0xff]
      %v219 = vld [vmem:[#allocation8 + $0x58] sm:$0xff]
      %v220 = vld [vmem:[#allocation8 + $0x60] sm:$0xff]
      %v221 = vld [vmem:[#allocation8 + $0x68] sm:$0xff]
      %v222 = vld [vmem:[#allocation8 + $0x70] sm:$0xff]
      %v223 = vld [vmem:[#allocation8 + $0x78] sm:$0xff]
      %224 = vmatprep.subr.mxu0 0.0
      %225 = vmatpush1.msra.mxu0 %v208
      %226 = vmatprep.subr.mxu0 0.0
      %227 = vmatpush1.msra.mxu0 %v209
      %228 = vmatprep.subr.mxu0 0.0
      %229 = vmatpush1.msra.mxu0 %v210
      %230 = vmatprep.subr.mxu0 0.0
      %231 = vmatpush1.msra.mxu0 %v211
      %232 = vmatprep.subr.mxu0 0.0
      %233 = vmatpush1.msra.mxu0 %v212
      %234 = vmatprep.subr.mxu0 0.0
      %235 = vmatpush1.msra.mxu0 %v213
      %236 = vmatprep.subr.mxu0 0.0
      %237 = vmatpush1.msra.mxu0 %v214
      %238 = vmatprep.subr.mxu0 0.0
      %239 = vmatpush1.msra.mxu0 %v215
      %240 = vmatprep.subr.mxu0 0.0
      %241 = vmatpush1.msra.mxu0 %v216
      %242 = vmatprep.subr.mxu0 0.0
      %243 = vmatpush1.msra.mxu0 %v217
      %244 = vmatprep.subr.mxu0 0.0
      %245 = vmatpush1.msra.mxu0 %v218
      %246 = vmatprep.subr.mxu0 0.0
      %247 = vmatpush1.msra.mxu0 %v219
      %248 = vmatprep.subr.mxu0 0.0
      %249 = vmatpush1.msra.mxu0 %v220
      %250 = vmatprep.subr.mxu0 0.0
      %251 = vmatpush1.msra.mxu0 %v221
      %252 = vmatprep.subr.mxu0 0.0
      %253 = vmatpush1.msra.mxu0 %v222
      %254 = vmatprep.subr.mxu0 0.0
      %255 = vmatpush1.msra.mxu0 %v223
      %256 = vmatprep.subr.mxu0 0.0
      %257 = vmatpush1.msra.mxu0 0.0
      %258 = vmatprep.subr.mxu0 0.0
      %259 = vmatpush1.msra.mxu0 0.0
      %260 = vmatprep.subr.mxu0 0.0
      %261 = vmatpush1.msra.mxu0 0.0
      %262 = vmatprep.subr.mxu0 0.0
      %263 = vmatpush1.msra.mxu0 0.0
      %264 = vmatprep.subr.mxu0 0.0
      %265 = vmatpush1.msra.mxu0 0.0
      %266 = vmatprep.subr.mxu0 0.0
      %267 = vmatpush1.msra.mxu0 0.0
      %268 = vmatprep.subr.mxu0 0.0
      %269 = vmatpush1.msra.mxu0 0.0
      %270 = vmatprep.subr.mxu0 0.0
      %271 = vmatpush1.msra.mxu0 0.0
      %272 = vmatprep.subr.mxu0 0.0
      %273 = vmatpush1.msra.mxu0 0.0
      %274 = vmatprep.subr.mxu0 0.0
      %275 = vmatpush1.msra.mxu0 0.0
      %276 = vmatprep.subr.mxu0 0.0
      %277 = vmatpush1.msra.mxu0 0.0
      %278 = vmatprep.subr.mxu0 0.0
      %279 = vmatpush1.msra.mxu0 0.0
      %280 = vmatprep.subr.mxu0 0.0
      %281 = vmatpush1.msra.mxu0 0.0
      %282 = vmatprep.subr.mxu0 0.0
      %283 = vmatpush1.msra.mxu0 0.0
      %284 = vmatprep.subr.mxu0 0.0
      %285 = vmatpush1.msra.mxu0 0.0
      %286 = vmatprep.subr.mxu0 0.0
      %287 = vmatpush1.msra.mxu0 0.0
      %288 = vmatprep.mubr.f32.mxu0 0.0
      %289 = vmatmul.mubr.f32.gmra.mrb[0].mxu0 %v207
      %v290 = vpop.f32.mrb[0].mxu0
      %v291 = vadd.f32 0.0, %v290
      %v292 = vpop.f32.mrb[0].mxu0
      %293 = vdwg.mxu0
      %v294 = vmul.f32 %v291, %v291
      %v295 = vsel %vm67, %v294, 0.0
      %296 = vadd.xlane.f32.xlu0 %v295
      %v297 = vpop.xlane.xlu0 %296
      %v298 = vmax.f32 %v297, 1e-24
      %v299 = vrsqrt.pop %v298
      %v300 = vmul.f32 %v291, %v299
      %301 = vst [vmem:[#allocation9] sm:$0x3] %v300
    $region37: #{tpu_custom_call.1} parent=1 // pred_fallthru
      _
    // Predicated region
    $region38: #{tpu_custom_call.1} parent=1 // pred_check
      _
    $region39: #{tpu_custom_call.1} parent=1 // pred_check_branch
      %303 = sbr.rel (0) target = $region41
    $region40: #{tpu_custom_call.1} parent=1 // pred_region
      %s305 = ssub.s32 32, 32
      %306 = vsyncadd [#allocation5], %s305
      %s308 = sshll.u32 [#allocation9], 4
      %s309 = int_to_ptr.vmem [resolvable:$true] %s308
      %311 = dma.vmem_to_hbm [thread:$0]  %s309, 32, %s4, [#allocation5]
    $region41: #{tpu_custom_call.1} parent=1 // pred_fallthru
      _
    // Predicated region
    $region42: #{tpu_custom_call.1} parent=1 // pred_check
      _
    $region43: #{tpu_custom_call.1} parent=1 // pred_check_branch
      %313 = sbr.rel (0) target = $region45
    $region44: #{tpu_custom_call.1} parent=1 // pred_region
      %314 = dma.done [#allocation5], 32
    $region45: #{tpu_custom_call.1} parent=1 // pred_fallthru
      _
    %315 = vsyncpa [#allocation4], 1
    %316 = vsyncpa [#allocation7], 1
    %317 = vsyncpa [#allocation5], 1

</llo_original>
